<compile_context>
chip_gen: v7x
topology: tpu7x:2x2x1
jax: 0.10.0
libtpu: 0.0.40
codegen_flags: <defaults>
</compile_context>

<pallas_src>
import numpy as np
import jax
import jax.numpy as jnp
from jax import lax
from jax.experimental import pallas as pl
from jax.experimental.pallas import tpu as pltpu


# ----------------------------- Pallas kernel: SE for one batch block ---------------------
def se_kernel(x_ref, w1_ref, b1_ref, w2_ref, b2_ref, o_ref):
    # x_ref / o_ref : (Bt, C, HW)   (spatial on the 128-lane axis)
    # w1 : (nh, C)   b1 : (1, nh)   w2 : (C, nh)   b2 : (1, C)
    x = x_ref[...].astype(jnp.float32)                       # (Bt, C, HW)

    # squeeze: global average pool over the lane-dense spatial axis (XLU reduce)
    pooled = jnp.mean(x, axis=-1)                            # (Bt, C)

    # excitation MLP entirely on the VPU/XLU — exact f32, zero MXU round-trips.
    #   h[b, j] = sum_c pooled[b, c] * w1[j, c]
    h = jnp.sum(pooled[:, None, :] * w1_ref[...][None, :, :], axis=-1) + b1_ref[...]
    h = jnp.maximum(h, 0.0)                                  # ReLU -> (Bt, nh)
    #   s[b, c] = sum_j h[b, j] * w2[c, j]
    s = jnp.sum(h[:, None, :] * w2_ref[...][None, :, :], axis=-1) + b2_ref[...]
    s = jax.nn.sigmoid(s)                                    # (Bt, C), exp on the EUP

    # scale: per-(batch, channel) scalar broadcast along the lane-dense spatial axis
    o_ref[...] = (x * s[:, :, None]).astype(o_ref.dtype)


# ----------------------------- wrapper ---------------------------------------------------
def _pick_batch_block(B, per_image_bytes, target_bytes=4 << 20):
    """Largest divisor Bt of B such that one block stays <= target_bytes and,
    when B >= 2, the grid keeps >= 2 steps (both v7x TensorCores busy and the
    BlockSpec pipeline has an i+1 prefetch / i-1 writeback to overlap)."""
    best = 1
    for bt in range(1, B + 1):
        if B % bt:
            continue
        if bt > 1 and bt * per_image_bytes > target_bytes:
            continue
        if B >= 2 and (B // bt) < 2:
            continue
        best = bt
    return best


def se_forward(x_nchw, w1, b1, w2, b2):
    B, C, H, W = x_nchw.shape
    HW = H * W
    nh = w1.shape[0]
    assert w1.shape == (nh, C)
    assert w2.shape == (C, nh), "SE requires Cin == Cout for the x * se broadcast"

    # nn.Linear-style 1-D biases -> lane-dense rows for the kernel.
    b1_row = jnp.asarray(b1).reshape(1, nh)
    b2_row = jnp.asarray(b2).reshape(1, C)

    # Free flatten of NCHW so H*W sits on the 128-lane axis (HW = 256 here -> fully
    # lane-dense loads/stores).
    # TODO(synk): for NVAE stages where H*W is not a multiple of 128, pad/regroup the
    # spatial axis to a 128 multiple to avoid masked vst.msk partial stores.
    x2 = x_nchw.reshape(B, C, HW)

    itemsize = jnp.dtype(x_nchw.dtype).itemsize
    per_image_bytes = C * HW * itemsize
    Bt = _pick_batch_block(B, per_image_bytes)
    grid = (B // Bt,)

    # Explicit VMEM budget: double-buffered input + output blocks plus the (tiny)
    # resident weights; floor at 16 MiB (v5e default), cap well inside v7x's 64 MiB.
    block_bytes = Bt * per_image_bytes
    weight_bytes = 4 * (w1.size + w2.size + nh + C)
    vmem_need = 4 * block_bytes + 2 * weight_bytes + (2 << 20)
    vmem_limit = int(min(max(vmem_need, 16 << 20), 48 << 20))

    out = pl.pallas_call(
        se_kernel,
        out_shape=jax.ShapeDtypeStruct((B, C, HW), x_nchw.dtype),
        grid=grid,
        in_specs=[
            pl.BlockSpec((Bt, C, HW), lambda b: (b, 0, 0)),  # x block (batched)
            pl.BlockSpec((nh, C), lambda b: (0, 0)),         # w1  (out, in) nn.Linear layout
            pl.BlockSpec((1, nh), lambda b: (0, 0)),         # b1  (lane-dense row)
            pl.BlockSpec((C, nh), lambda b: (0, 0)),         # w2
            pl.BlockSpec((1, C), lambda b: (0, 0)),          # b2  (lane-dense row)
        ],
        out_specs=pl.BlockSpec((Bt, C, HW), lambda b: (b, 0, 0)),
        compiler_params=pltpu.CompilerParams(
            dimension_semantics=("parallel",),
            vmem_limit_bytes=vmem_limit,
        ),
    )(x2, w1, b1_row, w2, b2_row)
    return out.reshape(B, C, H, W)


# ----------------------------- pure-JAX reference (for verification) ---------------------
def se_ref(x, w1, b1, w2, b2):
    pooled = jnp.mean(x, axis=(2, 3))                                        # (B, C)
    h = jnp.maximum(jnp.dot(pooled, w1.T, precision=lax.Precision.HIGHEST) + b1, 0.0)
    s = jax.nn.sigmoid(jnp.dot(h, w2.T, precision=lax.Precision.HIGHEST) + b2)
    return x * s[:, :, None, None]


if __name__ == "__main__":
    B, Cin, H, W = 2, 32, 16, 16
    Cout = Cin                                   # required for x * se to broadcast (as in PyTorch)
    num_hidden = max(Cout // 16, 4)              # = 4

    key = jax.random.PRNGKey(0)
    kx, k1, k2, k3, k4 = jax.random.split(key, 5)
    x = jax.random.normal(kx, (B, Cin, H, W), jnp.float32)

    # nn.Linear-style parameters: weight (out_features, in_features), bias (out_features,)
    w1 = (1.0 / jnp.sqrt(Cin)) * jax.random.normal(k1, (num_hidden, Cin), jnp.float32)
    b1 = (1.0 / jnp.sqrt(Cin)) * jax.random.normal(k2, (num_hidden,), jnp.float32)
    w2 = (1.0 / jnp.sqrt(num_hidden)) * jax.random.normal(k3, (Cout, num_hidden), jnp.float32)
    b2 = (1.0 / jnp.sqrt(num_hidden)) * jax.random.normal(k4, (Cout,), jnp.float32)

    out = jax.block_until_ready(se_forward(x, w1, b1, w2, b2))

    ref = se_ref(x, w1, b1, w2, b2)
    np.testing.assert_allclose(np.asarray(out), np.asarray(ref), rtol=1e-4, atol=1e-5)

    print("KERNEL_OK")
</pallas_src>

<mosaic_0001>
module attributes {stable_mosaic.version = 11 : i64} {
  func.func @se_kernel(%arg0: i32, %arg1: memref<1x32x256xf32, #tpu.memory_space<vmem>>, %arg2: memref<4x32xf32, #tpu.memory_space<vmem>>, %arg3: memref<1x4xf32, #tpu.memory_space<vmem>>, %arg4: memref<32x4xf32, #tpu.memory_space<vmem>>, %arg5: memref<1x32xf32, #tpu.memory_space<vmem>>, %arg6: memref<1x32x256xf32, #tpu.memory_space<vmem>>) attributes {dimension_semantics = [#tpu.dimension_semantics<parallel>], iteration_bounds = array<i64: 2>, scalar_prefetch = 0 : i64, scratch_operands = 0 : i64, tpu.core_type = #tpu.core_type<tc>, window_params = [{transform_indices = @transform_0, window_bounds = array<i64: 1, 32, 256>}, {pipeline_mode = #tpu.pipeline_mode<synchronous>, transform_indices = @transform_1, window_bounds = array<i64: 4, 32>}, {pipeline_mode = #tpu.pipeline_mode<synchronous>, transform_indices = @transform_2, window_bounds = array<i64: 1, 4>}, {pipeline_mode = #tpu.pipeline_mode<synchronous>, transform_indices = @transform_3, window_bounds = array<i64: 32, 4>}, {pipeline_mode = #tpu.pipeline_mode<synchronous>, transform_indices = @transform_4, window_bounds = array<i64: 1, 32>}, {transform_indices = @transform_5, window_bounds = array<i64: 1, 32, 256>}]} {
    %c0 = arith.constant 0 : index
    %c0_0 = arith.constant 0 : index
    %c0_1 = arith.constant 0 : index
    %0 = vector.load %arg1[%c0, %c0_0, %c0_1] : memref<1x32x256xf32, #tpu.memory_space<vmem>>, vector<1x32x256xf32>
    %cst = arith.constant dense<0.000000e+00> : vector<1x32xf32>
    %1 = vector.multi_reduction <add>, %0, %cst [2] : vector<1x32x256xf32> to vector<1x32xf32>
    %cst_2 = arith.constant 2.560000e+02 : f32
    %2 = vector.broadcast %cst_2 : f32 to vector<1x32xf32>
    %3 = arith.divf %1, %2 : vector<1x32xf32>
    %4 = vector.shape_cast %3 : vector<1x32xf32> to vector<1x1x32xf32>
    %c0_3 = arith.constant 0 : index
    %c0_4 = arith.constant 0 : index
    %5 = vector.load %arg2[%c0_3, %c0_4] : memref<4x32xf32, #tpu.memory_space<vmem>>, vector<4x32xf32>
    %6 = vector.shape_cast %5 : vector<4x32xf32> to vector<1x4x32xf32>
    %7 = vector.broadcast %4 : vector<1x1x32xf32> to vector<1x4x32xf32>
    %8 = arith.mulf %7, %6 : vector<1x4x32xf32>
    %cst_5 = arith.constant dense<0.000000e+00> : vector<1x4xf32>
    %9 = vector.multi_reduction <add>, %8, %cst_5 [2] : vector<1x4x32xf32> to vector<1x4xf32>
    %c0_6 = arith.constant 0 : index
    %c0_7 = arith.constant 0 : index
    %10 = vector.load %arg3[%c0_6, %c0_7] : memref<1x4xf32, #tpu.memory_space<vmem>>, vector<1x4xf32>
    %11 = arith.addf %9, %10 : vector<1x4xf32>
    %cst_8 = arith.constant 0.000000e+00 : f32
    %12 = vector.broadcast %cst_8 : f32 to vector<1x4xf32>
    %13 = arith.maximumf %11, %12 : vector<1x4xf32>
    %14 = vector.shape_cast %13 : vector<1x4xf32> to vector<1x1x4xf32>
    %c0_9 = arith.constant 0 : index
    %c0_10 = arith.constant 0 : index
    %15 = vector.load %arg4[%c0_9, %c0_10] : memref<32x4xf32, #tpu.memory_space<vmem>>, vector<32x4xf32>
    %16 = vector.shape_cast %15 : vector<32x4xf32> to vector<1x32x4xf32>
    %17 = vector.broadcast %14 : vector<1x1x4xf32> to vector<1x32x4xf32>
    %18 = arith.mulf %17, %16 : vector<1x32x4xf32>
    %cst_11 = arith.constant dense<0.000000e+00> : vector<1x32xf32>
    %19 = vector.multi_reduction <add>, %18, %cst_11 [2] : vector<1x32x4xf32> to vector<1x32xf32>
    %c0_12 = arith.constant 0 : index
    %c0_13 = arith.constant 0 : index
    %20 = vector.load %arg5[%c0_12, %c0_13] : memref<1x32xf32, #tpu.memory_space<vmem>>, vector<1x32xf32>
    %21 = arith.addf %19, %20 : vector<1x32xf32>
    %22 = arith.negf %21 : vector<1x32xf32>
    %23 = math.exp %22 : vector<1x32xf32>
    %cst_14 = arith.constant 1.000000e+00 : f32
    %24 = vector.broadcast %cst_14 : f32 to vector<1x32xf32>
    %25 = arith.addf %24, %23 : vector<1x32xf32>
    %26 = arith.divf %24, %25 : vector<1x32xf32>
    %27 = vector.shape_cast %26 : vector<1x32xf32> to vector<1x32x1xf32>
    %28 = vector.broadcast %27 : vector<1x32x1xf32> to vector<1x32x256xf32>
    %29 = arith.mulf %0, %28 : vector<1x32x256xf32>
    %c0_15 = arith.constant 0 : index
    %c0_16 = arith.constant 0 : index
    %c0_17 = arith.constant 0 : index
    %30 = vector.load %arg6[%c0_15, %c0_16, %c0_17] : memref<1x32x256xf32, #tpu.memory_space<vmem>>, vector<1x32x256xf32>
    tpu.vector_store %arg6[%c0_15, %c0_16, %c0_17], %29 {strides = array<i32>} : memref<1x32x256xf32, #tpu.memory_space<vmem>>, vector<1x32x256xf32>,
    return
  }
  func.func @transform_0(%arg0: i32) -> (i32, i32, i32) {
    %c0_i32 = arith.constant 0 : i32
    %c0_i32_0 = arith.constant 0 : i32
    %c0_i32_1 = arith.constant 0 : i32
    return %arg0, %c0_i32, %c0_i32_0 : i32, i32, i32
  }
  func.func @transform_1(%arg0: i32) -> (i32, i32) {
    %c0_i32 = arith.constant 0 : i32
    %c0_i32_0 = arith.constant 0 : i32
    %c0_i32_1 = arith.constant 0 : i32
    return %c0_i32, %c0_i32_0 : i32, i32
  }
  func.func @transform_2(%arg0: i32) -> (i32, i32) {
    %c0_i32 = arith.constant 0 : i32
    %c0_i32_0 = arith.constant 0 : i32
    %c0_i32_1 = arith.constant 0 : i32
    return %c0_i32, %c0_i32_0 : i32, i32
  }
  func.func @transform_3(%arg0: i32) -> (i32, i32) {
    %c0_i32 = arith.constant 0 : i32
    %c0_i32_0 = arith.constant 0 : i32
    %c0_i32_1 = arith.constant 0 : i32
    return %c0_i32, %c0_i32_0 : i32, i32
  }
  func.func @transform_4(%arg0: i32) -> (i32, i32) {
    %c0_i32 = arith.constant 0 : i32
    %c0_i32_0 = arith.constant 0 : i32
    %c0_i32_1 = arith.constant 0 : i32
    return %c0_i32, %c0_i32_0 : i32, i32
  }
  func.func @transform_5(%arg0: i32) -> (i32, i32, i32) {
    %c0_i32 = arith.constant 0 : i32
    %c0_i32_0 = arith.constant 0 : i32
    %c0_i32_1 = arith.constant 0 : i32
    return %arg0, %c0_i32, %c0_i32_0 : i32, i32, i32
  }
}

</mosaic_0001>

<llo_original>
// kernel: tpu_custom_call.1
$region0: #{tpu_custom_call.1}
  #allocation0 [shape = 'u32[]', space=smem, size = 0x4, offset = 0x4, fixed_abs, tag = 'smem constant byte address 0x4 - core index']
  #allocation1 [shape = 'u32[144,128]{1,0:T(1,128)}', space=vmem, size = 0x12000, scoped, tag = 'internal scratch']
  %s0 = inlined_call_operand.hbm [shape: f32[2,32,256], index: 0, kind: input, shape index: {}]
  %s1 = inlined_call_operand.vmem [shape: f32[4,32], index: 1, kind: input, shape index: {}]
  %s2 = inlined_call_operand.vmem [shape: f32[1,4], index: 2, kind: input, shape index: {}]
  %s3 = inlined_call_operand.vmem [shape: f32[32,4], index: 3, kind: input, shape index: {}]
  %s4 = inlined_call_operand.vmem [shape: f32[1,32], index: 4, kind: input, shape index: {}]
  %s5 = inlined_call_operand.hbm [shape: f32[2,32,256], index: 5, kind: output, shape index: {}]
  %s6 = sld [smem:[#allocation0]]
  $region57: #{tpu_custom_call.1} parent=0
    _
  %s8 = ssub.s32 1, %s6
  %s9 = scalar_select 0, %s8, %s6
  $region1: #{tpu_custom_call.1} parent=0
    #allocation2 [shape = 'u8[65536]{0}', space=vmem, size = 0x10000, scoped, tag = 'input window, operand 0']
    #allocation3 [shape = 's32[2]{0}', space=sflag, size = 0x8, scoped, tag = 'scoped memory for tpu_custom_call.1']
    #allocation4 [shape = 's32[2]{0}', space=sflag, size = 0x8, scoped, tag = 'scoped memory for tpu_custom_call.1']
    #allocation5 [shape = 'u8[65536]{0}', space=vmem, size = 0x10000, scoped, tag = 'output window, operand 0']
    %10 = vsyncpa [#allocation3], 0
    %s11 = scalar_lea.sflag [#allocation3], 1
    %12 = vsyncpa %s11, 0
    %13 = vsyncpa [#allocation4], 0
    %s14 = scalar_lea.sflag [#allocation4], 1
    %15 = vsyncpa %s14, 0
    loop: start=0, step=1, limit=4
    $region2: #{tpu_custom_call.1} parent=1 // loop_pre_header
      _
    $region3: #{tpu_custom_call.1} parent=1 // loop_header
      %s17 = sphi 0, %s21
      %p18 = scmp.ge.s32.totalorder %s17, 4
      %s27 = sphi 0, %s29
      %s30 = sphi 0, %s27
      %s31 = sphi 0, %s30
      %s47 = sphi 0, %s31
      %s51 = sphi 0, %s51
      %s53 = sphi 0, %s51
      %s54 = sphi 0, %s53
      %s68 = sphi 0, %s54
      %s72 = sphi 0, %s72
      %s74 = sphi 0, %s72
      %s75 = sphi 0, %s74
      %s89 = sphi 0, %s75
      %s93 = sphi 0, %s93
      %s95 = sphi 0, %s93
      %s96 = sphi 0, %s95
      %s110 = sphi 0, %s96
      %s114 = sphi 0, %s114
      %s116 = sphi 0, %s114
      %s117 = sphi 0, %s116
      %s131 = sphi 0, %s117
      %s137 = sphi 0, %s139
      %s140 = sphi 0, %s137
      %s141 = sphi 0, %s140
      %s157 = sphi 0, %s141
    $region4: #{tpu_custom_call.1} parent=1 // loop_header_branch
      %20 = sbr.rel (%p18) target = $region8
    $region5: #{tpu_custom_call.1} parent=1 // loop_body
      %s22 = ssub.s32 %s17, 1
      %s23 = ssub.s32 %s17, 2
      %s24 = sadd.s32 %s17, 1
      %s25 = ssub.s32 %s17, %s24
      %p26 = scmp.eq.s32.totalorder %s25, 0
      %s28 = sadd.s32 %s27, 1
      %s29 = scalar_select %p26, %s27, %s28
      %p32 = pneg %p26
      %p33 = scmp.eq.s32.totalorder %s17, 1
      %p34 = por %p32, %p33
      %p35 = scmp.ne.s32.totalorder %s27, %s30
      %p36 = scmp.eq.s32.totalorder %s17, 0
      %p37 = por %p35, %p36
      %p38 = scmp.ne.s32.totalorder %s27, %s30
      %p39 = scmp.eq.s32.totalorder %s22, 1
      %p40 = por %p38, %p39
      %p41 = scmp.ne.s32.totalorder %s30, %s31
      %p42 = scmp.eq.s32.totalorder %s22, 0
      %p43 = por %p41, %p42
      %p44 = scmp.ne.s32.totalorder %s30, %s31
      %p45 = scmp.eq.s32.totalorder %s23, 1
      %p46 = por %p44, %p45
      %p48 = scmp.ne.s32.totalorder %s31, %s47
      %p49 = scmp.eq.s32.totalorder %s23, 0
      %p50 = por %p48, %p49
      %s52 = sadd.s32 %s51, 1
      %p55 = scmp.eq.s32.totalorder %s17, 1
      %p56 = scmp.ne.s32.totalorder %s51, %s53
      %p57 = scmp.eq.s32.totalorder %s17, 0
      %p58 = por %p56, %p57
      %p59 = scmp.ne.s32.totalorder %s51, %s53
      %p60 = scmp.eq.s32.totalorder %s22, 1
      %p61 = por %p59, %p60
      %p62 = scmp.ne.s32.totalorder %s53, %s54
      %p63 = scmp.eq.s32.totalorder %s22, 0
      %p64 = por %p62, %p63
      %p65 = scmp.ne.s32.totalorder %s53, %s54
      %p66 = scmp.eq.s32.totalorder %s23, 1
      %p67 = por %p65, %p66
      %p69 = scmp.ne.s32.totalorder %s54, %s68
      %p70 = scmp.eq.s32.totalorder %s23, 0
      %p71 = por %p69, %p70
      %s73 = sadd.s32 %s72, 1
      %p76 = scmp.eq.s32.totalorder %s17, 1
      %p77 = scmp.ne.s32.totalorder %s72, %s74
      %p78 = scmp.eq.s32.totalorder %s17, 0
      %p79 = por %p77, %p78
      %p80 = scmp.ne.s32.totalorder %s72, %s74
      %p81 = scmp.eq.s32.totalorder %s22, 1
      %p82 = por %p80, %p81
      %p83 = scmp.ne.s32.totalorder %s74, %s75
      %p84 = scmp.eq.s32.totalorder %s22, 0
      %p85 = por %p83, %p84
      %p86 = scmp.ne.s32.totalorder %s74, %s75
      %p87 = scmp.eq.s32.totalorder %s23, 1
      %p88 = por %p86, %p87
      %p90 = scmp.ne.s32.totalorder %s75, %s89
      %p91 = scmp.eq.s32.totalorder %s23, 0
      %p92 = por %p90, %p91
      %s94 = sadd.s32 %s93, 1
      %p97 = scmp.eq.s32.totalorder %s17, 1
      %p98 = scmp.ne.s32.totalorder %s93, %s95
      %p99 = scmp.eq.s32.totalorder %s17, 0
      %p100 = por %p98, %p99
      %p101 = scmp.ne.s32.totalorder %s93, %s95
      %p102 = scmp.eq.s32.totalorder %s22, 1
      %p103 = por %p101, %p102
      %p104 = scmp.ne.s32.totalorder %s95, %s96
      %p105 = scmp.eq.s32.totalorder %s22, 0
      %p106 = por %p104, %p105
      %p107 = scmp.ne.s32.totalorder %s95, %s96
      %p108 = scmp.eq.s32.totalorder %s23, 1
      %p109 = por %p107, %p108
      %p111 = scmp.ne.s32.totalorder %s96, %s110
      %p112 = scmp.eq.s32.totalorder %s23, 0
      %p113 = por %p111, %p112
      %s115 = sadd.s32 %s114, 1
      %p118 = scmp.eq.s32.totalorder %s17, 1
      %p119 = scmp.ne.s32.totalorder %s114, %s116
      %p120 = scmp.eq.s32.totalorder %s17, 0
      %p121 = por %p119, %p120
      %p122 = scmp.ne.s32.totalorder %s114, %s116
      %p123 = scmp.eq.s32.totalorder %s22, 1
      %p124 = por %p122, %p123
      %p125 = scmp.ne.s32.totalorder %s116, %s117
      %p126 = scmp.eq.s32.totalorder %s22, 0
      %p127 = por %p125, %p126
      %p128 = scmp.ne.s32.totalorder %s116, %s117
      %p129 = scmp.eq.s32.totalorder %s23, 1
      %p130 = por %p128, %p129
      %p132 = scmp.ne.s32.totalorder %s117, %s131
      %p133 = scmp.eq.s32.totalorder %s23, 0
      %p134 = por %p132, %p133
      %s135 = ssub.s32 %s17, %s24
      %p136 = scmp.eq.s32.totalorder %s135, 0
      %s138 = sadd.s32 %s137, 1
      %s139 = scalar_select %p136, %s137, %s138
      %p142 = pneg %p136
      %p143 = scmp.eq.s32.totalorder %s17, 1
      %p144 = por %p142, %p143
      %p145 = scmp.ne.s32.totalorder %s137, %s140
      %p146 = scmp.eq.s32.totalorder %s17, 0
      %p147 = por %p145, %p146
      %p148 = scmp.ne.s32.totalorder %s137, %s140
      %p149 = scmp.eq.s32.totalorder %s22, 1
      %p150 = por %p148, %p149
      %p151 = scmp.ne.s32.totalorder %s140, %s141
      %p152 = scmp.eq.s32.totalorder %s22, 0
      %p153 = por %p151, %p152
      %p154 = scmp.ne.s32.totalorder %s140, %s141
      %p155 = scmp.eq.s32.totalorder %s23, 1
      %p156 = por %p154, %p155
      %p158 = scmp.ne.s32.totalorder %s141, %s157
      %p159 = scmp.eq.s32.totalorder %s23, 0
      %p160 = por %p158, %p159
      %p161 = scmp.le.s32.totalorder 1, %s17
      %p162 = scmp.lt.s32.totalorder %s17, 3
      %p163 = pnand %p161, %p162
      %p164 = pneg %p163
      // Predicated region
      $region9: #{tpu_custom_call.1} parent=5 // pred_check
        _
      $region10: #{tpu_custom_call.1} parent=5 // pred_check_branch
        %166 = sbr.rel (%p163) target = $region12
      $region11: #{tpu_custom_call.1} parent=5 // pred_region
        %s167 = ssub.s32 %s17, 1
        // Predicated region
        $region13: #{tpu_custom_call.1} parent=11 // pred_check
          %p168 = pneg %p64
        $region14: #{tpu_custom_call.1} parent=11 // pred_check_branch
          %170 = sbr.rel (%p168) target = $region16
        $region15: #{tpu_custom_call.1} parent=11 // pred_region
          _
        $region16: #{tpu_custom_call.1} parent=11 // pred_fallthru
          _
        // Predicated region
        $region17: #{tpu_custom_call.1} parent=11 // pred_check
          %p171 = pneg %p85
        $region18: #{tpu_custom_call.1} parent=11 // pred_check_branch
          %173 = sbr.rel (%p171) target = $region20
        $region19: #{tpu_custom_call.1} parent=11 // pred_region
          _
        $region20: #{tpu_custom_call.1} parent=11 // pred_fallthru
          _
        // Predicated region
        $region21: #{tpu_custom_call.1} parent=11 // pred_check
          %p174 = pneg %p106
        $region22: #{tpu_custom_call.1} parent=11 // pred_check_branch
          %176 = sbr.rel (%p174) target = $region24
        $region23: #{tpu_custom_call.1} parent=11 // pred_region
          _
        $region24: #{tpu_custom_call.1} parent=11 // pred_fallthru
          _
        // Predicated region
        $region25: #{tpu_custom_call.1} parent=11 // pred_check
          %p177 = pneg %p127
        $region26: #{tpu_custom_call.1} parent=11 // pred_check_branch
          %179 = sbr.rel (%p177) target = $region28
        $region27: #{tpu_custom_call.1} parent=11 // pred_region
          _
        $region28: #{tpu_custom_call.1} parent=11 // pred_fallthru
          _
      $region12: #{tpu_custom_call.1} parent=5 // pred_fallthru
        _
      %p180 = scmp.lt.s32.totalorder %s17, 2
      // Predicated region
      $region29: #{tpu_custom_call.1} parent=5 // pred_check
        %p181 = pneg %p180
      $region30: #{tpu_custom_call.1} parent=5 // pred_check_branch
        %183 = sbr.rel (%p181) target = $region32
      $region31: #{tpu_custom_call.1} parent=5 // pred_region
        // Predicated region
        $region33: #{tpu_custom_call.1} parent=31 // pred_check
          %p184 = pneg %p37
        $region34: #{tpu_custom_call.1} parent=31 // pred_check_branch
          %186 = sbr.rel (%p184) target = $region36
        $region35: #{tpu_custom_call.1} parent=31 // pred_region
          %s187 = sand.u32 %s27, 1
          %s188 = scalar_lea.sflag [#allocation3], %s187
          %s189 = sand.u32 %s27, 1
          %s190 = smul.addr %s189, 64
          %s191 = scalar_lea.vmem [#allocation2], %s190
          %s193 = ssub.s32 1024, 1024
          %194 = vsyncadd %s188, %s193
          %s195 = smul.addr %s17, 8
          %s196 = smul.addr %s195, 128
          %s197 = scalar_lea.hbm %s0, %s196
          %s198 = sshll.u32 %s191, 4
          %s199 = int_to_ptr.vmem [resolvable:$true] %s198
          %204 = dma.hbm_to_vmem [thread:$0]  %s197, 1024, %s199, %s188, 256, 256, 16
        $region36: #{tpu_custom_call.1} parent=31 // pred_fallthru
          _
      $region32: #{tpu_custom_call.1} parent=5 // pred_fallthru
        _
      %p205 = scmp.le.s32.totalorder 1, %s17
      %p206 = scmp.lt.s32.totalorder %s17, 3
      %p207 = pnand %p205, %p206
      %p208 = pneg %p207
      // Predicated region
      $region37: #{tpu_custom_call.1} parent=5 // pred_check
        _
      $region38: #{tpu_custom_call.1} parent=5 // pred_check_branch
        %210 = sbr.rel (%p207) target = $region40
      $region39: #{tpu_custom_call.1} parent=5 // pred_region
        %s211 = ssub.s32 %s17, 1
        %s212 = sand.u32 %s30, 1
        %s213 = scalar_lea.sflag [#allocation3], %s212
        %s214 = sand.u32 %s30, 1
        %s215 = smul.addr %s214, 64
        %s216 = scalar_lea.vmem [#allocation2], %s215
        // Predicated region
        $region41: #{tpu_custom_call.1} parent=39 // pred_check
          %p217 = pneg %p43
        $region42: #{tpu_custom_call.1} parent=39 // pred_check_branch
          %219 = sbr.rel (%p217) target = $region44
        $region43: #{tpu_custom_call.1} parent=39 // pred_region
          %220 = dma.done %s213, 1024
        $region44: #{tpu_custom_call.1} parent=39 // pred_fallthru
          _
        %s221 = sand.u32 %s30, 1
        %s222 = scalar_lea.sflag [#allocation3], %s221
        %s223 = sand.u32 %s30, 1
        %s224 = smul.addr %s223, 64
        %s225 = scalar_lea.vmem [#allocation2], %s224
        %p226 = pneg %p43
        %p227 = pneg %p40
        %p228 = pneg %p64
        %p229 = pneg %p61
        %p230 = pneg %p85
        %p231 = pneg %p82
        %p232 = pneg %p106
        %p233 = pneg %p103
        %p234 = pneg %p127
        %p235 = pneg %p124
        %p236 = pneg %p153
        %p237 = pneg %p150
        %s238 = sand.u32 %s140, 1
        %s239 = scalar_lea.sflag [#allocation4], %s238
        %s240 = sand.u32 %s140, 1
        %s241 = smul.addr %s240, 64
        %s242 = scalar_lea.vmem [#allocation5], %s241
        %v243 = vld [vmem:[%s216] sm:$0xff]
        %v244 = vld [vmem:[%s216 + $0x8] sm:$0xff]
        %v245 = vld [vmem:[%s216 + $0x10] sm:$0xff]
        %v246 = vld [vmem:[%s216 + $0x18] sm:$0xff]
        %v247 = vld [vmem:[%s216 + $0x20] sm:$0xff]
        %v248 = vld [vmem:[%s216 + $0x28] sm:$0xff]
        %v249 = vld [vmem:[%s216 + $0x30] sm:$0xff]
        %v250 = vld [vmem:[%s216 + $0x38] sm:$0xff]
        %v251 = vadd.f32 %v243, %v244
        %252 = vadd.xlane.f32.xlu0 %v251
        %v253 = vpop.xlane.xlu0 %252
        %v254 = vadd.f32 %v245, %v246
        %255 = vadd.xlane.f32.xlu0 %v254
        %v256 = vpop.xlane.xlu0 %255
        %v257 = vadd.f32 %v247, %v248
        %258 = vadd.xlane.f32.xlu0 %v257
        %v259 = vpop.xlane.xlu0 %258
        %v260 = vadd.f32 %v249, %v250
        %261 = vadd.xlane.f32.xlu0 %v260
        %v262 = vpop.xlane.xlu0 %261
        %v263 = vrcp.pop 256.0
        %v264 = vmul.f32 %v253, %v263
        %v265 = vmul.f32 %v256, %v263
        %v266 = vmul.f32 %v259, %v263
        %v267 = vmul.f32 %v262, %v263
        %v268 = vld [vmem:[%s1] sm:$0xf]
        %v270 = vlaneseq
        %v271 = vshrl.u32 %v270, 7
        %v272 = vsub.s32 0, %v271
        %v273 = vrot.slane %v268, %v272
        %275 = vbcast.lane.b32.xlu0 %v273, 256
        %v276 = vpop.permute.xlu0 %275
        %s278 = sor.u32 256, 8
        %279 = vbcast.lane.b32.xlu0 %v273, %s278
        %v280 = vpop.permute.xlu0 %279
        %s282 = sor.u32 256, 16
        %283 = vbcast.lane.b32.xlu0 %v273, %s282
        %v284 = vpop.permute.xlu0 %283
        %s286 = sor.u32 256, 24
        %287 = vbcast.lane.b32.xlu0 %v273, %s286
        %v288 = vpop.permute.xlu0 %287
        %v289 = vlaneseq
        %v290 = vshrl.u32 %v289, 7
        %v291 = vsub.s32 1, %v290
        %v292 = vrot.slane %v268, %v291
        %294 = vbcast.lane.b32.xlu0 %v292, 256
        %v295 = vpop.permute.xlu0 %294
        %s297 = sor.u32 256, 8
        %298 = vbcast.lane.b32.xlu0 %v292, %s297
        %v299 = vpop.permute.xlu0 %298
        %s301 = sor.u32 256, 16
        %302 = vbcast.lane.b32.xlu0 %v292, %s301
        %v303 = vpop.permute.xlu0 %302
        %s305 = sor.u32 256, 24
        %306 = vbcast.lane.b32.xlu0 %v292, %s305
        %v307 = vpop.permute.xlu0 %306
        %v308 = vlaneseq
        %v309 = vshrl.u32 %v308, 7
        %v310 = vsub.s32 2, %v309
        %v311 = vrot.slane %v268, %v310
        %313 = vbcast.lane.b32.xlu0 %v311, 256
        %v314 = vpop.permute.xlu0 %313
        %s316 = sor.u32 256, 8
        %317 = vbcast.lane.b32.xlu0 %v311, %s316
        %v318 = vpop.permute.xlu0 %317
        %s320 = sor.u32 256, 16
        %321 = vbcast.lane.b32.xlu0 %v311, %s320
        %v322 = vpop.permute.xlu0 %321
        %s324 = sor.u32 256, 24
        %325 = vbcast.lane.b32.xlu0 %v311, %s324
        %v326 = vpop.permute.xlu0 %325
        %v327 = vlaneseq
        %v328 = vshrl.u32 %v327, 7
        %v329 = vsub.s32 3, %v328
        %v330 = vrot.slane %v268, %v329
        %332 = vbcast.lane.b32.xlu0 %v330, 256
        %v333 = vpop.permute.xlu0 %332
        %s335 = sor.u32 256, 8
        %336 = vbcast.lane.b32.xlu0 %v330, %s335
        %v337 = vpop.permute.xlu0 %336
        %s339 = sor.u32 256, 16
        %340 = vbcast.lane.b32.xlu0 %v330, %s339
        %v341 = vpop.permute.xlu0 %340
        %s343 = sor.u32 256, 24
        %344 = vbcast.lane.b32.xlu0 %v330, %s343
        %v345 = vpop.permute.xlu0 %344
        %v362 = vmul.f32 %v264, %v276
        %v363 = vmul.f32 %v265, %v280
        %v364 = vmul.f32 %v266, %v284
        %v365 = vmul.f32 %v267, %v288
        %v366 = vmul.f32 %v264, %v295
        %v367 = vmul.f32 %v265, %v299
        %v368 = vmul.f32 %v266, %v303
        %v369 = vmul.f32 %v267, %v307
        %v370 = vmul.f32 %v264, %v314
        %v371 = vmul.f32 %v265, %v318
        %v372 = vmul.f32 %v266, %v322
        %v373 = vmul.f32 %v267, %v326
        %v374 = vmul.f32 %v264, %v333
        %v375 = vmul.f32 %v265, %v337
        %v376 = vmul.f32 %v266, %v341
        %v377 = vmul.f32 %v267, %v345
        %394 = vset.pattern.permute.xlu0 0
        %395 = vperm.xlu0 %394, %v362
        %v396 = vpop.permute.xlu0 %395
        %397 = vset.pattern.permute.xlu0 0
        %398 = vperm.xlu0 %397, %v363
        %v399 = vpop.permute.xlu0 %398
        %400 = vset.pattern.permute.xlu0 0
        %401 = vperm.xlu0 %400, %v364
        %v402 = vpop.permute.xlu0 %401
        %403 = vset.pattern.permute.xlu0 0
        %404 = vperm.xlu0 %403, %v365
        %v405 = vpop.permute.xlu0 %404
        %406 = vset.pattern.permute.xlu0 0
        %407 = vperm.xlu0 %406, %v366
        %v408 = vpop.permute.xlu0 %407
        %409 = vset.pattern.permute.xlu0 0
        %410 = vperm.xlu0 %409, %v367
        %v411 = vpop.permute.xlu0 %410
        %412 = vset.pattern.permute.xlu0 0
        %413 = vperm.xlu0 %412, %v368
        %v414 = vpop.permute.xlu0 %413
        %415 = vset.pattern.permute.xlu0 0
        %416 = vperm.xlu0 %415, %v369
        %v417 = vpop.permute.xlu0 %416
        %418 = vset.pattern.permute.xlu0 0
        %419 = vperm.xlu0 %418, %v370
        %v420 = vpop.permute.xlu0 %419
        %421 = vset.pattern.permute.xlu0 0
        %422 = vperm.xlu0 %421, %v371
        %v423 = vpop.permute.xlu0 %422
        %424 = vset.pattern.permute.xlu0 0
        %425 = vperm.xlu0 %424, %v372
        %v426 = vpop.permute.xlu0 %425
        %427 = vset.pattern.permute.xlu0 0
        %428 = vperm.xlu0 %427, %v373
        %v429 = vpop.permute.xlu0 %428
        %430 = vset.pattern.permute.xlu0 0
        %431 = vperm.xlu0 %430, %v374
        %v432 = vpop.permute.xlu0 %431
        %433 = vset.pattern.permute.xlu0 0
        %434 = vperm.xlu0 %433, %v375
        %v435 = vpop.permute.xlu0 %434
        %436 = vset.pattern.permute.xlu0 0
        %437 = vperm.xlu0 %436, %v376
        %v438 = vpop.permute.xlu0 %437
        %439 = vset.pattern.permute.xlu0 0
        %440 = vperm.xlu0 %439, %v377
        %v441 = vpop.permute.xlu0 %440
        %v442 = vlaneseq
        %v443 = vand.u32 %v442, 127
        %v444 = vlaneseq
        %v445 = vshrl.u32 %v444, 7
        %v446 = vsub.s32 %v443, %v445
        %v447 = vrot.slane %v396, %v446
        %v448 = vadd.s32 %v443, 4294967288
        %v449 = vlaneseq
        %v450 = vshrl.u32 %v449, 7
        %v451 = vsub.s32 %v448, %v450
        %v452 = vrot.slane %v399, %v451
        %vm453 = vcmask 130112
        %v454 = vsel %vm453, %v452, %v447
        %v455 = vadd.s32 %v443, 4294967280
        %v456 = vlaneseq
        %v457 = vshrl.u32 %v456, 7
        %v458 = vsub.s32 %v455, %v457
        %v459 = vrot.slane %v402, %v458
        %vm460 = vcmask 195712
        %v461 = vsel %vm460, %v459, %v454
        %v462 = vadd.s32 %v443, 4294967272
        %v463 = vlaneseq
        %v464 = vshrl.u32 %v463, 7
        %v465 = vsub.s32 %v462, %v464
        %v466 = vrot.slane %v405, %v465
        %vm467 = vcmask 261312
        %v468 = vsel %vm467, %v466, %v461
        %v469 = vlaneseq
        %v470 = vshrl.u32 %v469, 7
        %v471 = vsub.s32 %v443, %v470
        %v472 = vrot.slane %v408, %v471
        %v473 = vlaneseq
        %v474 = vshrl.u32 %v473, 7
        %v475 = vsub.s32 %v448, %v474
        %v476 = vrot.slane %v411, %v475
        %v477 = vsel %vm453, %v476, %v472
        %v478 = vlaneseq
        %v479 = vshrl.u32 %v478, 7
        %v480 = vsub.s32 %v455, %v479
        %v481 = vrot.slane %v414, %v480
        %v482 = vsel %vm460, %v481, %v477
        %v483 = vlaneseq
        %v484 = vshrl.u32 %v483, 7
        %v485 = vsub.s32 %v462, %v484
        %v486 = vrot.slane %v417, %v485
        %v487 = vsel %vm467, %v486, %v482
        %v488 = vlaneseq
        %v489 = vshrl.u32 %v488, 7
        %v490 = vsub.s32 %v443, %v489
        %v491 = vrot.slane %v420, %v490
        %v492 = vlaneseq
        %v493 = vshrl.u32 %v492, 7
        %v494 = vsub.s32 %v448, %v493
        %v495 = vrot.slane %v423, %v494
        %v496 = vsel %vm453, %v495, %v491
        %v497 = vlaneseq
        %v498 = vshrl.u32 %v497, 7
        %v499 = vsub.s32 %v455, %v498
        %v500 = vrot.slane %v426, %v499
        %v501 = vsel %vm460, %v500, %v496
        %v502 = vlaneseq
        %v503 = vshrl.u32 %v502, 7
        %v504 = vsub.s32 %v462, %v503
        %v505 = vrot.slane %v429, %v504
        %v506 = vsel %vm467, %v505, %v501
        %v507 = vlaneseq
        %v508 = vshrl.u32 %v507, 7
        %v509 = vsub.s32 %v443, %v508
        %v510 = vrot.slane %v432, %v509
        %v511 = vlaneseq
        %v512 = vshrl.u32 %v511, 7
        %v513 = vsub.s32 %v448, %v512
        %v514 = vrot.slane %v435, %v513
        %v515 = vsel %vm453, %v514, %v510
        %v516 = vlaneseq
        %v517 = vshrl.u32 %v516, 7
        %v518 = vsub.s32 %v455, %v517
        %v519 = vrot.slane %v438, %v518
        %v520 = vsel %vm460, %v519, %v515
        %v521 = vlaneseq
        %v522 = vshrl.u32 %v521, 7
        %v523 = vsub.s32 %v462, %v522
        %v524 = vrot.slane %v441, %v523
        %v525 = vsel %vm467, %v524, %v520
        %vm526 = vcmask 1041409
        %v527 = vsel %vm526, %v487, %v468
        %vm528 = vcmask 1042434
        %v529 = vsel %vm528, %v506, %v527
        %vm530 = vcmask 1043459
        %v531 = vsel %vm530, %v525, %v529
        %vm533 = vcmask 257024
        %v534 = vsel %vm533, %v531, 0.0
        %535 = vadd.xlane.f32.xlu0 %v534
        %v536 = vpop.xlane.xlu0 %535
        %v537 = vld [vmem:[%s2] sm:$0x1]
        %v539 = vlaneseq
        %v540 = vshrl.u32 %v539, 7
        %v541 = vsub.s32 0, %v540
        %v542 = vrot.slane %v537, %v541
        %544 = vbcast.lane.b32.xlu0 %v542, 256
        %v545 = vpop.permute.xlu0 %544
        %v547 = vadd.f32 %v536, %v545
        %v548 = vmax.f32 %v547, 0.0
        %v549 = vld [vmem:[%s3] sm:$0xff]
        %v550 = vld [vmem:[%s3 + $0x8] sm:$0xff]
        %v551 = vld [vmem:[%s3 + $0x10] sm:$0xff]
        %v552 = vld [vmem:[%s3 + $0x18] sm:$0xff]
        %v557 = vlaneseq
        %v558 = vshrl.u32 %v557, 7
        %v559 = vsub.s32 0, %v558
        %v560 = vrot.slane %v549, %v559
        %562 = vbcast.lane.b32.xlu0 %v560, 256
        %v563 = vpop.permute.xlu0 %562
        %v564 = vlaneseq
        %v565 = vshrl.u32 %v564, 7
        %v566 = vsub.s32 1, %v565
        %v567 = vrot.slane %v549, %v566
        %569 = vbcast.lane.b32.xlu0 %v567, 256
        %v570 = vpop.permute.xlu0 %569
        %v571 = vlaneseq
        %v572 = vshrl.u32 %v571, 7
        %v573 = vsub.s32 2, %v572
        %v574 = vrot.slane %v549, %v573
        %576 = vbcast.lane.b32.xlu0 %v574, 256
        %v577 = vpop.permute.xlu0 %576
        %v578 = vlaneseq
        %v579 = vshrl.u32 %v578, 7
        %v580 = vsub.s32 3, %v579
        %v581 = vrot.slane %v549, %v580
        %583 = vbcast.lane.b32.xlu0 %v581, 256
        %v584 = vpop.permute.xlu0 %583
        %v585 = vlaneseq
        %v586 = vshrl.u32 %v585, 7
        %v587 = vsub.s32 4, %v586
        %v588 = vrot.slane %v549, %v587
        %590 = vbcast.lane.b32.xlu0 %v588, 256
        %v591 = vpop.permute.xlu0 %590
        %v592 = vlaneseq
        %v593 = vshrl.u32 %v592, 7
        %v594 = vsub.s32 5, %v593
        %v595 = vrot.slane %v549, %v594
        %597 = vbcast.lane.b32.xlu0 %v595, 256
        %v598 = vpop.permute.xlu0 %597
        %v599 = vlaneseq
        %v600 = vshrl.u32 %v599, 7
        %v601 = vsub.s32 6, %v600
        %v602 = vrot.slane %v549, %v601
        %604 = vbcast.lane.b32.xlu0 %v602, 256
        %v605 = vpop.permute.xlu0 %604
        %v606 = vlaneseq
        %v607 = vshrl.u32 %v606, 7
        %v608 = vsub.s32 7, %v607
        %v609 = vrot.slane %v549, %v608
        %611 = vbcast.lane.b32.xlu0 %v609, 256
        %v612 = vpop.permute.xlu0 %611
        %v613 = vlaneseq
        %v614 = vshrl.u32 %v613, 7
        %v615 = vsub.s32 0, %v614
        %v616 = vrot.slane %v550, %v615
        %618 = vbcast.lane.b32.xlu0 %v616, 256
        %v619 = vpop.permute.xlu0 %618
        %v620 = vlaneseq
        %v621 = vshrl.u32 %v620, 7
        %v622 = vsub.s32 1, %v621
        %v623 = vrot.slane %v550, %v622
        %625 = vbcast.lane.b32.xlu0 %v623, 256
        %v626 = vpop.permute.xlu0 %625
        %v627 = vlaneseq
        %v628 = vshrl.u32 %v627, 7
        %v629 = vsub.s32 2, %v628
        %v630 = vrot.slane %v550, %v629
        %632 = vbcast.lane.b32.xlu0 %v630, 256
        %v633 = vpop.permute.xlu0 %632
        %v634 = vlaneseq
        %v635 = vshrl.u32 %v634, 7
        %v636 = vsub.s32 3, %v635
        %v637 = vrot.slane %v550, %v636
        %639 = vbcast.lane.b32.xlu0 %v637, 256
        %v640 = vpop.permute.xlu0 %639
        %v641 = vlaneseq
        %v642 = vshrl.u32 %v641, 7
        %v643 = vsub.s32 4, %v642
        %v644 = vrot.slane %v550, %v643
        %646 = vbcast.lane.b32.xlu0 %v644, 256
        %v647 = vpop.permute.xlu0 %646
        %v648 = vlaneseq
        %v649 = vshrl.u32 %v648, 7
        %v650 = vsub.s32 5, %v649
        %v651 = vrot.slane %v550, %v650
        %653 = vbcast.lane.b32.xlu0 %v651, 256
        %v654 = vpop.permute.xlu0 %653
        %v655 = vlaneseq
        %v656 = vshrl.u32 %v655, 7
        %v657 = vsub.s32 6, %v656
        %v658 = vrot.slane %v550, %v657
        %660 = vbcast.lane.b32.xlu0 %v658, 256
        %v661 = vpop.permute.xlu0 %660
        %v662 = vlaneseq
        %v663 = vshrl.u32 %v662, 7
        %v664 = vsub.s32 7, %v663
        %v665 = vrot.slane %v550, %v664
        %667 = vbcast.lane.b32.xlu0 %v665, 256
        %v668 = vpop.permute.xlu0 %667
        %v669 = vlaneseq
        %v670 = vshrl.u32 %v669, 7
        %v671 = vsub.s32 0, %v670
        %v672 = vrot.slane %v551, %v671
        %674 = vbcast.lane.b32.xlu0 %v672, 256
        %v675 = vpop.permute.xlu0 %674
        %v676 = vlaneseq
        %v677 = vshrl.u32 %v676, 7
        %v678 = vsub.s32 1, %v677
        %v679 = vrot.slane %v551, %v678
        %681 = vbcast.lane.b32.xlu0 %v679, 256
        %v682 = vpop.permute.xlu0 %681
        %v683 = vlaneseq
        %v684 = vshrl.u32 %v683, 7
        %v685 = vsub.s32 2, %v684
        %v686 = vrot.slane %v551, %v685
        %688 = vbcast.lane.b32.xlu0 %v686, 256
        %v689 = vpop.permute.xlu0 %688
        %v690 = vlaneseq
        %v691 = vshrl.u32 %v690, 7
        %v692 = vsub.s32 3, %v691
        %v693 = vrot.slane %v551, %v692
        %695 = vbcast.lane.b32.xlu0 %v693, 256
        %v696 = vpop.permute.xlu0 %695
        %v697 = vlaneseq
        %v698 = vshrl.u32 %v697, 7
        %v699 = vsub.s32 4, %v698
        %v700 = vrot.slane %v551, %v699
        %702 = vbcast.lane.b32.xlu0 %v700, 256
        %v703 = vpop.permute.xlu0 %702
        %v704 = vlaneseq
        %v705 = vshrl.u32 %v704, 7
        %v706 = vsub.s32 5, %v705
        %v707 = vrot.slane %v551, %v706
        %709 = vbcast.lane.b32.xlu0 %v707, 256
        %v710 = vpop.permute.xlu0 %709
        %v711 = vlaneseq
        %v712 = vshrl.u32 %v711, 7
        %v713 = vsub.s32 6, %v712
        %v714 = vrot.slane %v551, %v713
        %716 = vbcast.lane.b32.xlu0 %v714, 256
        %v717 = vpop.permute.xlu0 %716
        %v718 = vlaneseq
        %v719 = vshrl.u32 %v718, 7
        %v720 = vsub.s32 7, %v719
        %v721 = vrot.slane %v551, %v720
        %723 = vbcast.lane.b32.xlu0 %v721, 256
        %v724 = vpop.permute.xlu0 %723
        %v725 = vlaneseq
        %v726 = vshrl.u32 %v725, 7
        %v727 = vsub.s32 0, %v726
        %v728 = vrot.slane %v552, %v727
        %730 = vbcast.lane.b32.xlu0 %v728, 256
        %v731 = vpop.permute.xlu0 %730
        %v732 = vlaneseq
        %v733 = vshrl.u32 %v732, 7
        %v734 = vsub.s32 1, %v733
        %v735 = vrot.slane %v552, %v734
        %737 = vbcast.lane.b32.xlu0 %v735, 256
        %v738 = vpop.permute.xlu0 %737
        %v739 = vlaneseq
        %v740 = vshrl.u32 %v739, 7
        %v741 = vsub.s32 2, %v740
        %v742 = vrot.slane %v552, %v741
        %744 = vbcast.lane.b32.xlu0 %v742, 256
        %v745 = vpop.permute.xlu0 %744
        %v746 = vlaneseq
        %v747 = vshrl.u32 %v746, 7
        %v748 = vsub.s32 3, %v747
        %v749 = vrot.slane %v552, %v748
        %751 = vbcast.lane.b32.xlu0 %v749, 256
        %v752 = vpop.permute.xlu0 %751
        %v753 = vlaneseq
        %v754 = vshrl.u32 %v753, 7
        %v755 = vsub.s32 4, %v754
        %v756 = vrot.slane %v552, %v755
        %758 = vbcast.lane.b32.xlu0 %v756, 256
        %v759 = vpop.permute.xlu0 %758
        %v760 = vlaneseq
        %v761 = vshrl.u32 %v760, 7
        %v762 = vsub.s32 5, %v761
        %v763 = vrot.slane %v552, %v762
        %765 = vbcast.lane.b32.xlu0 %v763, 256
        %v766 = vpop.permute.xlu0 %765
        %v767 = vlaneseq
        %v768 = vshrl.u32 %v767, 7
        %v769 = vsub.s32 6, %v768
        %v770 = vrot.slane %v552, %v769
        %772 = vbcast.lane.b32.xlu0 %v770, 256
        %v773 = vpop.permute.xlu0 %772
        %v774 = vlaneseq
        %v775 = vshrl.u32 %v774, 7
        %v776 = vsub.s32 7, %v775
        %v777 = vrot.slane %v552, %v776
        %779 = vbcast.lane.b32.xlu0 %v777, 256
        %v780 = vpop.permute.xlu0 %779
        %v813 = vmul.f32 %v548, %v563
        %v814 = vmul.f32 %v548, %v570
        %v815 = vmul.f32 %v548, %v577
        %v816 = vmul.f32 %v548, %v584
        %v817 = vmul.f32 %v548, %v591
        %v818 = vmul.f32 %v548, %v598
        %v819 = vmul.f32 %v548, %v605
        %v820 = vmul.f32 %v548, %v612
        %v821 = vmul.f32 %v548, %v619
        %v822 = vmul.f32 %v548, %v626
        %v823 = vmul.f32 %v548, %v633
        %v824 = vmul.f32 %v548, %v640
        %v825 = vmul.f32 %v548, %v647
        %v826 = vmul.f32 %v548, %v654
        %v827 = vmul.f32 %v548, %v661
        %v828 = vmul.f32 %v548, %v668
        %v829 = vmul.f32 %v548, %v675
        %v830 = vmul.f32 %v548, %v682
        %v831 = vmul.f32 %v548, %v689
        %v832 = vmul.f32 %v548, %v696
        %v833 = vmul.f32 %v548, %v703
        %v834 = vmul.f32 %v548, %v710
        %v835 = vmul.f32 %v548, %v717
        %v836 = vmul.f32 %v548, %v724
        %v837 = vmul.f32 %v548, %v731
        %v838 = vmul.f32 %v548, %v738
        %v839 = vmul.f32 %v548, %v745
        %v840 = vmul.f32 %v548, %v752
        %v841 = vmul.f32 %v548, %v759
        %v842 = vmul.f32 %v548, %v766
        %v843 = vmul.f32 %v548, %v773
        %v844 = vmul.f32 %v548, %v780
        %877 = vset.pattern.permute.xlu0 0
        %878 = vperm.xlu0 %877, %v813
        %v879 = vpop.permute.xlu0 %878
        %880 = vset.pattern.permute.xlu0 0
        %881 = vperm.xlu0 %880, %v814
        %v882 = vpop.permute.xlu0 %881
        %883 = vset.pattern.permute.xlu0 0
        %884 = vperm.xlu0 %883, %v815
        %v885 = vpop.permute.xlu0 %884
        %886 = vset.pattern.permute.xlu0 0
        %887 = vperm.xlu0 %886, %v816
        %v888 = vpop.permute.xlu0 %887
        %889 = vset.pattern.permute.xlu0 0
        %890 = vperm.xlu0 %889, %v817
        %v891 = vpop.permute.xlu0 %890
        %892 = vset.pattern.permute.xlu0 0
        %893 = vperm.xlu0 %892, %v818
        %v894 = vpop.permute.xlu0 %893
        %895 = vset.pattern.permute.xlu0 0
        %896 = vperm.xlu0 %895, %v819
        %v897 = vpop.permute.xlu0 %896
        %898 = vset.pattern.permute.xlu0 0
        %899 = vperm.xlu0 %898, %v820
        %v900 = vpop.permute.xlu0 %899
        %901 = vset.pattern.permute.xlu0 0
        %902 = vperm.xlu0 %901, %v821
        %v903 = vpop.permute.xlu0 %902
        %904 = vset.pattern.permute.xlu0 0
        %905 = vperm.xlu0 %904, %v822
        %v906 = vpop.permute.xlu0 %905
        %907 = vset.pattern.permute.xlu0 0
        %908 = vperm.xlu0 %907, %v823
        %v909 = vpop.permute.xlu0 %908
        %910 = vset.pattern.permute.xlu0 0
        %911 = vperm.xlu0 %910, %v824
        %v912 = vpop.permute.xlu0 %911
        %913 = vset.pattern.permute.xlu0 0
        %914 = vperm.xlu0 %913, %v825
        %v915 = vpop.permute.xlu0 %914
        %916 = vset.pattern.permute.xlu0 0
        %917 = vperm.xlu0 %916, %v826
        %v918 = vpop.permute.xlu0 %917
        %919 = vset.pattern.permute.xlu0 0
        %920 = vperm.xlu0 %919, %v827
        %v921 = vpop.permute.xlu0 %920
        %922 = vset.pattern.permute.xlu0 0
        %923 = vperm.xlu0 %922, %v828
        %v924 = vpop.permute.xlu0 %923
        %925 = vset.pattern.permute.xlu0 0
        %926 = vperm.xlu0 %925, %v829
        %v927 = vpop.permute.xlu0 %926
        %928 = vset.pattern.permute.xlu0 0
        %929 = vperm.xlu0 %928, %v830
        %v930 = vpop.permute.xlu0 %929
        %931 = vset.pattern.permute.xlu0 0
        %932 = vperm.xlu0 %931, %v831
        %v933 = vpop.permute.xlu0 %932
        %934 = vset.pattern.permute.xlu0 0
        %935 = vperm.xlu0 %934, %v832
        %v936 = vpop.permute.xlu0 %935
        %937 = vset.pattern.permute.xlu0 0
        %938 = vperm.xlu0 %937, %v833
        %v939 = vpop.permute.xlu0 %938
        %940 = vset.pattern.permute.xlu0 0
        %941 = vperm.xlu0 %940, %v834
        %v942 = vpop.permute.xlu0 %941
        %943 = vset.pattern.permute.xlu0 0
        %944 = vperm.xlu0 %943, %v835
        %v945 = vpop.permute.xlu0 %944
        %946 = vset.pattern.permute.xlu0 0
        %947 = vperm.xlu0 %946, %v836
        %v948 = vpop.permute.xlu0 %947
        %949 = vset.pattern.permute.xlu0 0
        %950 = vperm.xlu0 %949, %v837
        %v951 = vpop.permute.xlu0 %950
        %952 = vset.pattern.permute.xlu0 0
        %953 = vperm.xlu0 %952, %v838
        %v954 = vpop.permute.xlu0 %953
        %955 = vset.pattern.permute.xlu0 0
        %956 = vperm.xlu0 %955, %v839
        %v957 = vpop.permute.xlu0 %956
        %958 = vset.pattern.permute.xlu0 0
        %959 = vperm.xlu0 %958, %v840
        %v960 = vpop.permute.xlu0 %959
        %961 = vset.pattern.permute.xlu0 0
        %962 = vperm.xlu0 %961, %v841
        %v963 = vpop.permute.xlu0 %962
        %964 = vset.pattern.permute.xlu0 0
        %965 = vperm.xlu0 %964, %v842
        %v966 = vpop.permute.xlu0 %965
        %967 = vset.pattern.permute.xlu0 0
        %968 = vperm.xlu0 %967, %v843
        %v969 = vpop.permute.xlu0 %968
        %970 = vset.pattern.permute.xlu0 0
        %971 = vperm.xlu0 %970, %v844
        %v972 = vpop.permute.xlu0 %971
        %v973 = vlaneseq
        %v974 = vshrl.u32 %v973, 7
        %v975 = vsub.s32 %v443, %v974
        %v976 = vrot.slane %v879, %v975
        %v977 = vlaneseq
        %v978 = vshrl.u32 %v977, 7
        %v979 = vsub.s32 %v443, %v978
        %v980 = vrot.slane %v882, %v979
        %v981 = vlaneseq
        %v982 = vshrl.u32 %v981, 7
        %v983 = vsub.s32 %v443, %v982
        %v984 = vrot.slane %v885, %v983
        %v985 = vlaneseq
        %v986 = vshrl.u32 %v985, 7
        %v987 = vsub.s32 %v443, %v986
        %v988 = vrot.slane %v888, %v987
        %v989 = vlaneseq
        %v990 = vshrl.u32 %v989, 7
        %v991 = vsub.s32 %v443, %v990
        %v992 = vrot.slane %v891, %v991
        %v993 = vlaneseq
        %v994 = vshrl.u32 %v993, 7
        %v995 = vsub.s32 %v443, %v994
        %v996 = vrot.slane %v894, %v995
        %v997 = vlaneseq
        %v998 = vshrl.u32 %v997, 7
        %v999 = vsub.s32 %v443, %v998
        %v1000 = vrot.slane %v897, %v999
        %v1001 = vlaneseq
        %v1002 = vshrl.u32 %v1001, 7
        %v1003 = vsub.s32 %v443, %v1002
        %v1004 = vrot.slane %v900, %v1003
        %v1005 = vlaneseq
        %v1006 = vshrl.u32 %v1005, 7
        %v1007 = vsub.s32 %v443, %v1006
        %v1008 = vrot.slane %v903, %v1007
        %v1009 = vlaneseq
        %v1010 = vshrl.u32 %v1009, 7
        %v1011 = vsub.s32 %v443, %v1010
        %v1012 = vrot.slane %v906, %v1011
        %v1013 = vlaneseq
        %v1014 = vshrl.u32 %v1013, 7
        %v1015 = vsub.s32 %v443, %v1014
        %v1016 = vrot.slane %v909, %v1015
        %v1017 = vlaneseq
        %v1018 = vshrl.u32 %v1017, 7
        %v1019 = vsub.s32 %v443, %v1018
        %v1020 = vrot.slane %v912, %v1019
        %v1021 = vlaneseq
        %v1022 = vshrl.u32 %v1021, 7
        %v1023 = vsub.s32 %v443, %v1022
        %v1024 = vrot.slane %v915, %v1023
        %v1025 = vlaneseq
        %v1026 = vshrl.u32 %v1025, 7
        %v1027 = vsub.s32 %v443, %v1026
        %v1028 = vrot.slane %v918, %v1027
        %v1029 = vlaneseq
        %v1030 = vshrl.u32 %v1029, 7
        %v1031 = vsub.s32 %v443, %v1030
        %v1032 = vrot.slane %v921, %v1031
        %v1033 = vlaneseq
        %v1034 = vshrl.u32 %v1033, 7
        %v1035 = vsub.s32 %v443, %v1034
        %v1036 = vrot.slane %v924, %v1035
        %v1037 = vlaneseq
        %v1038 = vshrl.u32 %v1037, 7
        %v1039 = vsub.s32 %v443, %v1038
        %v1040 = vrot.slane %v927, %v1039
        %v1041 = vlaneseq
        %v1042 = vshrl.u32 %v1041, 7
        %v1043 = vsub.s32 %v443, %v1042
        %v1044 = vrot.slane %v930, %v1043
        %v1045 = vlaneseq
        %v1046 = vshrl.u32 %v1045, 7
        %v1047 = vsub.s32 %v443, %v1046
        %v1048 = vrot.slane %v933, %v1047
        %v1049 = vlaneseq
        %v1050 = vshrl.u32 %v1049, 7
        %v1051 = vsub.s32 %v443, %v1050
        %v1052 = vrot.slane %v936, %v1051
        %v1053 = vlaneseq
        %v1054 = vshrl.u32 %v1053, 7
        %v1055 = vsub.s32 %v443, %v1054
        %v1056 = vrot.slane %v939, %v1055
        %v1057 = vlaneseq
        %v1058 = vshrl.u32 %v1057, 7
        %v1059 = vsub.s32 %v443, %v1058
        %v1060 = vrot.slane %v942, %v1059
        %v1061 = vlaneseq
        %v1062 = vshrl.u32 %v1061, 7
        %v1063 = vsub.s32 %v443, %v1062
        %v1064 = vrot.slane %v945, %v1063
        %v1065 = vlaneseq
        %v1066 = vshrl.u32 %v1065, 7
        %v1067 = vsub.s32 %v443, %v1066
        %v1068 = vrot.slane %v948, %v1067
        %v1069 = vlaneseq
        %v1070 = vshrl.u32 %v1069, 7
        %v1071 = vsub.s32 %v443, %v1070
        %v1072 = vrot.slane %v951, %v1071
        %v1073 = vlaneseq
        %v1074 = vshrl.u32 %v1073, 7
        %v1075 = vsub.s32 %v443, %v1074
        %v1076 = vrot.slane %v954, %v1075
        %v1077 = vlaneseq
        %v1078 = vshrl.u32 %v1077, 7
        %v1079 = vsub.s32 %v443, %v1078
        %v1080 = vrot.slane %v957, %v1079
        %v1081 = vlaneseq
        %v1082 = vshrl.u32 %v1081, 7
        %v1083 = vsub.s32 %v443, %v1082
        %v1084 = vrot.slane %v960, %v1083
        %v1085 = vlaneseq
        %v1086 = vshrl.u32 %v1085, 7
        %v1087 = vsub.s32 %v443, %v1086
        %v1088 = vrot.slane %v963, %v1087
        %v1089 = vlaneseq
        %v1090 = vshrl.u32 %v1089, 7
        %v1091 = vsub.s32 %v443, %v1090
        %v1092 = vrot.slane %v966, %v1091
        %v1093 = vlaneseq
        %v1094 = vshrl.u32 %v1093, 7
        %v1095 = vsub.s32 %v443, %v1094
        %v1096 = vrot.slane %v969, %v1095
        %v1097 = vlaneseq
        %v1098 = vshrl.u32 %v1097, 7
        %v1099 = vsub.s32 %v443, %v1098
        %v1100 = vrot.slane %v972, %v1099
        %v1101 = vsel %vm526, %v980, %v976
        %v1102 = vsel %vm528, %v984, %v1101
        %v1103 = vsel %vm530, %v988, %v1102
        %vm1104 = vcmask 1044484
        %v1105 = vsel %vm1104, %v992, %v1103
        %vm1106 = vcmask 1045509
        %v1107 = vsel %vm1106, %v996, %v1105
        %vm1108 = vcmask 1046534
        %v1109 = vsel %vm1108, %v1000, %v1107
        %vm1110 = vcmask 1047559
        %v1111 = vsel %vm1110, %v1004, %v1109
        %v1112 = vsel %vm526, %v1012, %v1008
        %v1113 = vsel %vm528, %v1016, %v1112
        %v1114 = vsel %vm530, %v1020, %v1113
        %v1115 = vsel %vm1104, %v1024, %v1114
        %v1116 = vsel %vm1106, %v1028, %v1115
        %v1117 = vsel %vm1108, %v1032, %v1116
        %v1118 = vsel %vm1110, %v1036, %v1117
        %v1119 = vsel %vm526, %v1044, %v1040
        %v1120 = vsel %vm528, %v1048, %v1119
        %v1121 = vsel %vm530, %v1052, %v1120
        %v1122 = vsel %vm1104, %v1056, %v1121
        %v1123 = vsel %vm1106, %v1060, %v1122
        %v1124 = vsel %vm1108, %v1064, %v1123
        %v1125 = vsel %vm1110, %v1068, %v1124
        %v1126 = vsel %vm526, %v1076, %v1072
        %v1127 = vsel %vm528, %v1080, %v1126
        %v1128 = vsel %vm530, %v1084, %v1127
        %v1129 = vsel %vm1104, %v1088, %v1128
        %v1130 = vsel %vm1106, %v1092, %v1129
        %v1131 = vsel %vm1108, %v1096, %v1130
        %v1132 = vsel %vm1110, %v1100, %v1131
        %vm1137 = vcmask 31744
        %v1138 = vsel %vm1137, %v1111, 0.0
        %1139 = vadd.xlane.f32.xlu0 %v1138
        %v1140 = vpop.xlane.xlu0 %1139
        %v1141 = vsel %vm1137, %v1118, 0.0
        %1142 = vadd.xlane.f32.xlu0 %v1141
        %v1143 = vpop.xlane.xlu0 %1142
        %v1144 = vsel %vm1137, %v1125, 0.0
        %1145 = vadd.xlane.f32.xlu0 %v1144
        %v1146 = vpop.xlane.xlu0 %1145
        %v1147 = vsel %vm1137, %v1132, 0.0
        %1148 = vadd.xlane.f32.xlu0 %v1147
        %v1149 = vpop.xlane.xlu0 %1148
        %v1150 = vld [vmem:[%s4] sm:$0x1]
        %v1152 = vlaneseq
        %v1153 = vshrl.u32 %v1152, 7
        %v1154 = vsub.s32 0, %v1153
        %v1155 = vrot.slane %v1150, %v1154
        %1157 = vbcast.lane.b32.xlu0 %v1155, 256
        %v1158 = vpop.permute.xlu0 %1157
        %s1160 = sor.u32 256, 8
        %1161 = vbcast.lane.b32.xlu0 %v1155, %s1160
        %v1162 = vpop.permute.xlu0 %1161
        %s1164 = sor.u32 256, 16
        %1165 = vbcast.lane.b32.xlu0 %v1155, %s1164
        %v1166 = vpop.permute.xlu0 %1165
        %s1168 = sor.u32 256, 24
        %1169 = vbcast.lane.b32.xlu0 %v1155, %s1168
        %v1170 = vpop.permute.xlu0 %1169
        %v1175 = vadd.f32 %v1140, %v1158
        %v1176 = vadd.f32 %v1143, %v1162
        %v1177 = vadd.f32 %v1146, %v1166
        %v1178 = vadd.f32 %v1149, %v1170
        %v1179 = vxor.u32 %v1175, 2147483648
        %v1180 = vxor.u32 %v1176, 2147483648
        %v1181 = vxor.u32 %v1177, 2147483648
        %v1182 = vxor.u32 %v1178, 2147483648
        %v1183 = vmul.f32 %v1179, 1.442695
        %v1184 = vpow.pop %v1183
        %v1185 = vmul.f32 %v1180, 1.442695
        %v1186 = vpow.pop %v1185
        %v1187 = vmul.f32 %v1181, 1.442695
        %v1188 = vpow.pop %v1187
        %v1189 = vmul.f32 %v1182, 1.442695
        %v1190 = vpow.pop %v1189
        %v1191 = vadd.f32 %v1184, 1.0
        %v1192 = vadd.f32 %v1186, 1.0
        %v1193 = vadd.f32 %v1188, 1.0
        %v1194 = vadd.f32 %v1190, 1.0
        %v1195 = vrcp.pop %v1191
        %v1196 = vmul.f32 1.0, %v1195
        %v1197 = vrcp.pop %v1192
        %v1198 = vmul.f32 1.0, %v1197
        %v1199 = vrcp.pop %v1193
        %v1200 = vmul.f32 1.0, %v1199
        %v1201 = vrcp.pop %v1194
        %v1202 = vmul.f32 1.0, %v1201
        %1204 = vset.pattern.permute.xlu0 0
        %1205 = vperm.xlu0 %1204, %v1196
        %v1206 = vpop.permute.xlu0 %1205
        %1209 = vset.pattern.permute.xlu0 0
        %1210 = vperm.xlu0 %1209, %v1198
        %v1211 = vpop.permute.xlu0 %1210
        %1214 = vset.pattern.permute.xlu0 0
        %1215 = vperm.xlu0 %1214, %v1200
        %v1216 = vpop.permute.xlu0 %1215
        %1219 = vset.pattern.permute.xlu0 0
        %1220 = vperm.xlu0 %1219, %v1202
        %v1221 = vpop.permute.xlu0 %1220
        %v1223 = vmul.f32 %v243, %v1206
        %v1224 = vmul.f32 %v244, %v1206
        %v1225 = vmul.f32 %v245, %v1211
        %v1226 = vmul.f32 %v246, %v1211
        %v1227 = vmul.f32 %v247, %v1216
        %v1228 = vmul.f32 %v248, %v1216
        %v1229 = vmul.f32 %v249, %v1221
        %v1230 = vmul.f32 %v250, %v1221
        %1231 = vst [vmem:[%s242] sm:$0xff] %v1223
        %1232 = vst [vmem:[%s242 + $0x8] sm:$0xff] %v1224
        %1233 = vst [vmem:[%s242 + $0x10] sm:$0xff] %v1225
        %1234 = vst [vmem:[%s242 + $0x18] sm:$0xff] %v1226
        %1235 = vst [vmem:[%s242 + $0x20] sm:$0xff] %v1227
        %1236 = vst [vmem:[%s242 + $0x28] sm:$0xff] %v1228
        %1237 = vst [vmem:[%s242 + $0x30] sm:$0xff] %v1229
        %1238 = vst [vmem:[%s242 + $0x38] sm:$0xff] %v1230
        %s1239 = sand.u32 %s140, 1
        %s1240 = scalar_lea.sflag [#allocation4], %s1239
        %s1241 = sand.u32 %s140, 1
        %s1242 = smul.addr %s1241, 64
        %s1243 = scalar_lea.vmem [#allocation5], %s1242
        // Predicated region
        $region45: #{tpu_custom_call.1} parent=39 // pred_check
          %p1244 = pneg %p150
        $region46: #{tpu_custom_call.1} parent=39 // pred_check_branch
          %1246 = sbr.rel (%p1244) target = $region48
        $region47: #{tpu_custom_call.1} parent=39 // pred_region
          %s1248 = ssub.s32 1024, 1024
          %1249 = vsyncadd %s1240, %s1248
          %s1250 = smul.addr %s22, 8
          %s1251 = smul.addr %s1250, 128
          %s1252 = scalar_lea.hbm %s5, %s1251
          %s1253 = sshll.u32 %s1243, 4
          %s1254 = int_to_ptr.vmem [resolvable:$true] %s1253
          %1259 = dma.vmem_to_hbm [thread:$0]  %s1254, 1024, %s1252, %s1240, 256, 256, 16
        $region48: #{tpu_custom_call.1} parent=39 // pred_fallthru
          _
      $region40: #{tpu_custom_call.1} parent=5 // pred_fallthru
        _
      %p1260 = scmp.le.s32.totalorder 2, %s17
      // Predicated region
      $region49: #{tpu_custom_call.1} parent=5 // pred_check
        %p1261 = pneg %p1260
      $region50: #{tpu_custom_call.1} parent=5 // pred_check_branch
        %1263 = sbr.rel (%p1261) target = $region52
      $region51: #{tpu_custom_call.1} parent=5 // pred_region
        %s1264 = ssub.s32 %s17, 2
        // Predicated region
        $region53: #{tpu_custom_call.1} parent=51 // pred_check
          %p1265 = pneg %p156
        $region54: #{tpu_custom_call.1} parent=51 // pred_check_branch
          %1267 = sbr.rel (%p1265) target = $region56
        $region55: #{tpu_custom_call.1} parent=51 // pred_region
          %s1268 = sand.u32 %s141, 1
          %s1269 = scalar_lea.sflag [#allocation4], %s1268
          %s1270 = sand.u32 %s141, 1
          %s1271 = smul.addr %s1270, 64
          %s1272 = scalar_lea.vmem [#allocation5], %s1271
          %1273 = dma.done %s1269, 1024
        $region56: #{tpu_custom_call.1} parent=51 // pred_fallthru
          _
      $region52: #{tpu_custom_call.1} parent=5 // pred_fallthru
        _
    $region6: #{tpu_custom_call.1} parent=1 // loop_footer
      %s21 = sadd.s32 1, %s17
    $region7: #{tpu_custom_call.1} parent=1 // loop_footer_branch
      %16 = sbr.rel target = $region3
    $region8: #{tpu_custom_call.1} parent=1 // loop_exit
      _
    %1274 = vsyncpa [#allocation3], 1
    %s1275 = scalar_lea.sflag [#allocation3], 1
    %1276 = vsyncpa %s1275, 1
    %1277 = vsyncpa [#allocation4], 1
    %s1278 = scalar_lea.sflag [#allocation4], 1
    %1279 = vsyncpa %s1278, 1

</llo_original>
